<compile_context>
chip_gen: v7x
topology: tpu7x:2x2x1
jax: 0.10.0
libtpu: 0.0.40
codegen_flags: <defaults>
</compile_context>

<pallas_src>
import jax
import jax.numpy as jnp
from jax import lax
from jax.experimental import pallas as pl
from jax.experimental.pallas import tpu as pltpu

B_TILE_MAX = 16  # batch elements per grid step (B_TILE_MAX*H rows on the MXU)


def _flow1_kernel(x_ref, w1_ref, w2_ref, b1_ref, b2_ref, o_ref):
    """x_ref:  (B, H, W*Ci)    bf16, H rows in deinterleaved order (evens, odds)
    w1_ref: (3*W*Ci, W*Co)   bf16   (conv1 taps, block-diag over W)
    w2_ref: (3*W*Co, Wo*2Co) bf16   (conv2_1 + conv2_2 + even-W subsample)
    b1_ref: (1, W*Co)        f32
    b2_ref: (1, Wo*2Co)      f32
    o_ref:  (B, Ho, Wo*2Co)  f32
    """
    B, H, LI = x_ref.shape
    Ho = o_ref.shape[1]

    def stack_taps(v):
        # Lane-concat [v[h-1] | v[h] | v[h+1]] of a (3,1) 'same'-padded conv,
        # expressed in the deinterleaved-H order (even rows then odd rows):
        # every H shift is a contiguous sublane slice — no strided/gather ops.
        zero = jnp.zeros((B, 1, v.shape[-1]), v.dtype)
        up = jnp.concatenate([zero, v[:, Ho:H - 1, :], v[:, :Ho, :]], axis=1)
        down = jnp.concatenate([v[:, Ho:, :], v[:, 1:Ho, :], zero], axis=1)
        return jnp.concatenate([up, v, down], axis=-1)          # (B, H, 3*L)

    # conv1 (3,1) + bias + relu: one (B*H, 3*W*Ci) @ (3*W*Ci, W*Co) MXU matmul.
    x = x_ref[...]
    y1 = jnp.dot(stack_taps(x).reshape(B * H, 3 * LI), w1_ref[...],
                 preferred_element_type=jnp.float32)
    y1 = jnp.maximum(y1 + b1_ref[...], 0.0)                     # f32 epilogue

    # conv2_1 (1,3) + conv2_2 (3,1) + relu + channel concat + even-W subsample
    # folded into one (B*H, 3*W*Co) @ (3*W*Co, Wo*2Co) matmul.
    y1b = y1.astype(jnp.bfloat16).reshape(B, H, -1)
    cat = jnp.dot(stack_taps(y1b).reshape(B * H, -1), w2_ref[...],
                  preferred_element_type=jnp.float32)
    cat = jnp.maximum(cat + b2_ref[...], 0.0).reshape(B, H, -1)

    # MaxPool2d((2,1), stride=2) along H: in deinterleaved order the pooling
    # pairs are (row p, row Ho+p) -> a single max of two static halves.
    o_ref[...] = jnp.maximum(cat[:, :Ho, :], cat[:, Ho:, :])


def init_params(key, in_channels=8, out_channels=8):
    ks = jax.random.split(key, 6)
    return {
        "w1":  0.1 * jax.random.normal(ks[0], (out_channels, in_channels, 3, 1), jnp.float32),
        "b1":  0.1 * jax.random.normal(ks[1], (out_channels,), jnp.float32),
        "w21": 0.1 * jax.random.normal(ks[2], (out_channels, out_channels, 1, 3), jnp.float32),
        "b21": 0.1 * jax.random.normal(ks[3], (out_channels,), jnp.float32),
        "w22": 0.1 * jax.random.normal(ks[4], (out_channels, out_channels, 3, 1), jnp.float32),
        "b22": 0.1 * jax.random.normal(ks[5], (out_channels,), jnp.float32),
    }


def prepare_params(params, W):
    """One-time packing of the PyTorch weights into lane-dense matmul matrices.
    Hoisted out of the forward hot path (was re-built on every call before)."""
    Co, Ci = params["w1"].shape[0], params["w1"].shape[1]
    Cc = 2 * Co
    Wo = (W - 1) // 2 + 1
    f32 = jnp.float32

    eye_w = jnp.eye(W, dtype=f32)
    eye_w_even = eye_w[:, 0::2]                         # (W, Wo): even-w outputs

    def taps_h(w):   # torch (Co, Ci, 3, 1) -> (3, Ci, Co)
        return jnp.transpose(w[:, :, :, 0], (2, 1, 0)).astype(f32)

    def taps_w(w):   # torch (Co, Ci, 1, 3) -> (3, Ci, Co)
        return jnp.transpose(w[:, :, 0, :], (2, 1, 0)).astype(f32)

    w1_t, w21_t, w22_t = taps_h(params["w1"]), taps_w(params["w21"]), taps_h(params["w22"])

    # conv1: rows [k*W*Ci:(k+1)*W*Ci] = block-diag(tap k) over W.
    w1_stack = jnp.concatenate([jnp.kron(eye_w, w1_t[k]) for k in range(3)], axis=0)

    # conv2_2 (3,1): same structure, restricted to even-w output columns.
    w22_stack = jnp.concatenate([jnp.kron(eye_w_even, w22_t[k]) for k in range(3)], axis=0)

    # conv2_1 (1,3): block-banded over W (input w = 2*wo + k - 1), even-w outputs,
    # acting only on the un-shifted middle tap chunk.
    w_idx = jnp.arange(W)[:, None]
    wo_idx = jnp.arange(Wo)[None, :]
    w21_band = sum(jnp.kron((w_idx == 2 * wo_idx + k - 1).astype(f32), w21_t[k])
                   for k in range(3))                                   # (W*Co, Wo*Co)
    w21_full = jnp.zeros((3 * W * Co, Wo * Co), f32).at[W * Co:2 * W * Co, :].set(w21_band)

    # Output columns ordered (wo, [conv2_1 channels | conv2_2 channels]) so the
    # NCHW epilogue is a single reshape + transpose.
    w2_comb = jnp.concatenate(
        [w21_full.reshape(3 * W * Co, Wo, Co),
         w22_stack.reshape(3 * W * Co, Wo, Co)], axis=-1).reshape(3 * W * Co, Wo * Cc)

    b1_row = jnp.tile(params["b1"].astype(f32), W)[None, :]                       # (1, W*Co)
    b2_row = jnp.tile(jnp.concatenate([params["b21"].astype(f32),
                                       params["b22"].astype(f32)]), Wo)[None, :]  # (1, Wo*Cc)

    return {
        "w1_stack": w1_stack.astype(jnp.bfloat16),   # bf16: 1 MXU pass, half the DMA
        "w2_comb":  w2_comb.astype(jnp.bfloat16),
        "b1": b1_row,                                # biases stay f32 (exact epilogue)
        "b2": b2_row,
    }


@jax.jit
def flow1_pallas(x_nchw, packed):
    N, Ci, H, W = x_nchw.shape
    assert H % 2 == 0, "H must be even"
    w1_stack, w2_comb = packed["w1_stack"], packed["w2_comb"]
    Co = w1_stack.shape[1] // W
    Cc = 2 * Co
    Ho = H // 2
    Wo = (W - 1) // 2 + 1

    # NCHW -> lane-dense, deinterleaved-H layout (N, H, W*Ci): d-row r < Ho holds
    # original row 2r, r >= Ho holds row 2(r-Ho)+1; lanes are (w, ci).
    # (Kept as wrapper glue to preserve the PyTorch NCHW interface; at large N an
    #  NHWC-native entry point would avoid this extra HBM round trip.)
    x_d = (jnp.transpose(x_nchw.reshape(N, Ci, Ho, 2, W), (0, 3, 2, 4, 1))
           .reshape(N, H, W * Ci).astype(jnp.bfloat16))

    # Batch tiling: as few fat steps as possible, but >= 2 steps when N > 1 so
    # both of v7x's TensorCores get work on the "parallel" grid axis.
    b_tile = min(B_TILE_MAX, N)
    if N > 1 and -(-N // b_tile) < 2:
        b_tile = -(-N // 2)
    steps = -(-N // b_tile)
    n_pad = steps * b_tile
    if n_pad != N:
        x_d = jnp.concatenate(
            [x_d, jnp.zeros((n_pad - N, H, W * Ci), x_d.dtype)], axis=0)

    out = pl.pallas_call(
        _flow1_kernel,
        out_shape=jax.ShapeDtypeStruct((n_pad, Ho, Wo * Cc), jnp.float32),
        grid_spec=pltpu.PrefetchScalarGridSpec(
            num_scalar_prefetch=0,
            grid=(steps,),
            in_specs=[
                pl.BlockSpec((b_tile, H, W * Ci), lambda n: (n, 0, 0)),     # x (bf16)
                pl.BlockSpec((3 * W * Ci, W * Co), lambda n: (0, 0)),       # w1_stack
                pl.BlockSpec((3 * W * Co, Wo * Cc), lambda n: (0, 0)),      # w2_comb
                pl.BlockSpec((1, W * Co), lambda n: (0, 0)),                # b1
                pl.BlockSpec((1, Wo * Cc), lambda n: (0, 0)),               # b2
            ],
            out_specs=pl.BlockSpec((b_tile, Ho, Wo * Cc), lambda n: (n, 0, 0)),
        ),
        compiler_params=pltpu.CompilerParams(
            dimension_semantics=("parallel",)),   # batch splits across v7x's 2 TCs
    )(x_d, w1_stack, w2_comb, packed["b1"], packed["b2"])

    out = out[:N]
    # (N, Ho, Wo*2Co) with lanes (wo, [co_21 | co_22]) -> NCHW, single reshape+transpose.
    return out.reshape(N, Ho, Wo, Cc).transpose(0, 3, 1, 2)


def flow1_reference(x, params):
    """Pure-JAX reference mirroring the PyTorch module (NCHW)."""
    dn = lax.conv_dimension_numbers(x.shape, params["w1"].shape,
                                    ("NCHW", "OIHW", "NCHW"))

    def conv(v, w, b, pad):
        y = lax.conv_general_dilated(v, w, window_strides=(1, 1), padding=pad,
                                     dimension_numbers=dn,
                                     precision=lax.Precision.HIGHEST)
        return y + b[None, :, None, None]

    y1 = jax.nn.relu(conv(x, params["w1"], params["b1"], ((1, 1), (0, 0))))
    y21 = jax.nn.relu(conv(y1, params["w21"], params["b21"], ((0, 0), (1, 1))))
    y22 = jax.nn.relu(conv(y1, params["w22"], params["b22"], ((1, 1), (0, 0))))
    cat = jnp.concatenate([y21, y22], axis=1)
    return lax.reduce_window(cat, -jnp.inf, lax.max,
                             window_dimensions=(1, 1, 2, 1),
                             window_strides=(1, 1, 2, 2),
                             padding="VALID")


if __name__ == "__main__":
    key = jax.random.PRNGKey(0)
    kx, kp = jax.random.split(key)

    # Module defaults: in_channels=8, H=W=16 (NCHW), batch=2.
    x = jax.random.normal(kx, (2, 8, 16, 16), jnp.float32)
    params = init_params(kp, in_channels=8, out_channels=8)
    packed = prepare_params(params, W=16)   # one-time packing, out of the hot path

    out = jax.block_until_ready(flow1_pallas(x, packed))
    ref = jax.block_until_ready(flow1_reference(x, params))
    assert out.shape == ref.shape == (2, 16, 8, 8), (out.shape, ref.shape)
    max_err = float(jnp.max(jnp.abs(out - ref)))
    assert max_err < 5e-2, f"max abs err {max_err}"   # bf16 matmul inputs, f32 accum

    # Also exercise the batched (b_tile > 1, multi-element grid step) path.
    x16 = jax.random.normal(jax.random.PRNGKey(1), (16, 8, 16, 16), jnp.float32)
    out16 = jax.block_until_ready(flow1_pallas(x16, packed))
    ref16 = jax.block_until_ready(flow1_reference(x16, params))
    assert out16.shape == ref16.shape == (16, 16, 8, 8)
    max_err16 = float(jnp.max(jnp.abs(out16 - ref16)))
    assert max_err16 < 5e-2, f"max abs err (batched) {max_err16}"

    print("KERNEL_OK")
</pallas_src>

<mosaic_0001>
module attributes {stable_mosaic.version = 11 : i64} {
  func.func @_flow1_kernel(%arg0: i32, %arg1: memref<1x16x128xbf16, #tpu.memory_space<vmem>>, %arg2: memref<384x128xbf16, #tpu.memory_space<vmem>>, %arg3: memref<384x128xbf16, #tpu.memory_space<vmem>>, %arg4: memref<1x128xf32, #tpu.memory_space<vmem>>, %arg5: memref<1x128xf32, #tpu.memory_space<vmem>>, %arg6: memref<1x8x128xf32, #tpu.memory_space<vmem>>) attributes {dimension_semantics = [#tpu.dimension_semantics<parallel>], iteration_bounds = array<i64: 2>, scalar_prefetch = 0 : i64, scratch_operands = 0 : i64, tpu.core_type = #tpu.core_type<tc>, window_params = [{transform_indices = @transform_0, window_bounds = array<i64: 1, 16, 128>}, {pipeline_mode = #tpu.pipeline_mode<synchronous>, transform_indices = @transform_1, window_bounds = array<i64: 384, 128>}, {pipeline_mode = #tpu.pipeline_mode<synchronous>, transform_indices = @transform_2, window_bounds = array<i64: 384, 128>}, {pipeline_mode = #tpu.pipeline_mode<synchronous>, transform_indices = @transform_3, window_bounds = array<i64: 1, 128>}, {pipeline_mode = #tpu.pipeline_mode<synchronous>, transform_indices = @transform_4, window_bounds = array<i64: 1, 128>}, {transform_indices = @transform_5, window_bounds = array<i64: 1, 8, 128>}]} {
    %c0 = arith.constant 0 : index
    %c0_0 = arith.constant 0 : index
    %c0_1 = arith.constant 0 : index
    %0 = vector.load %arg1[%c0, %c0_0, %c0_1] : memref<1x16x128xbf16, #tpu.memory_space<vmem>>, vector<1x16x128xbf16>
    %cst = arith.constant 0.000000e+00 : bf16
    %1 = vector.broadcast %cst : bf16 to vector<1x1x128xbf16>
    %2 = vector.extract_strided_slice %0 {offsets = [0, 8, 0], sizes = [1, 7, 128], strides = [1, 1, 1]} : vector<1x16x128xbf16> to vector<1x7x128xbf16>
    %3 = vector.extract_strided_slice %0 {offsets = [0, 0, 0], sizes = [1, 8, 128], strides = [1, 1, 1]} : vector<1x16x128xbf16> to vector<1x8x128xbf16>
    %4 = tpu.concatenate %1, %2, %3 in 1 : vector<1x1x128xbf16>, vector<1x7x128xbf16>, vector<1x8x128xbf16> -> vector<1x16x128xbf16>
    %5 = vector.extract_strided_slice %0 {offsets = [0, 8, 0], sizes = [1, 8, 128], strides = [1, 1, 1]} : vector<1x16x128xbf16> to vector<1x8x128xbf16>
    %6 = vector.extract_strided_slice %0 {offsets = [0, 1, 0], sizes = [1, 7, 128], strides = [1, 1, 1]} : vector<1x16x128xbf16> to vector<1x7x128xbf16>
    %7 = tpu.concatenate %5, %6, %1 in 1 : vector<1x8x128xbf16>, vector<1x7x128xbf16>, vector<1x1x128xbf16> -> vector<1x16x128xbf16>
    %8 = tpu.concatenate %4, %0, %7 in 2 : vector<1x16x128xbf16>, vector<1x16x128xbf16>, vector<1x16x128xbf16> -> vector<1x16x384xbf16>
    %9 = vector.shape_cast %8 : vector<1x16x384xbf16> to vector<16x384xbf16>
    %c0_2 = arith.constant 0 : index
    %c0_3 = arith.constant 0 : index
    %10 = vector.load %arg2[%c0_2, %c0_3] : memref<384x128xbf16, #tpu.memory_space<vmem>>, vector<384x128xbf16>
    %cst_4 = arith.constant dense<0.000000e+00> : vector<16x128xf32>
    %11 = tpu.matmul %9, %10, %cst_4 {dimension_numbers = #tpu.dot_dimension_numbers<[1], [0], [0], [1], [0, 0, 1, 1], [], []>} : vector<16x384xbf16>, vector<384x128xbf16>, vector<16x128xf32> -> vector<16x128xf32>
    %c0_5 = arith.constant 0 : index
    %c0_6 = arith.constant 0 : index
    %12 = vector.load %arg4[%c0_5, %c0_6] : memref<1x128xf32, #tpu.memory_space<vmem>>, vector<1x128xf32>
    %13 = vector.broadcast %12 : vector<1x128xf32> to vector<16x128xf32>
    %14 = arith.addf %11, %13 : vector<16x128xf32>
    %cst_7 = arith.constant 0.000000e+00 : f32
    %15 = vector.broadcast %cst_7 : f32 to vector<16x128xf32>
    %16 = arith.maximumf %14, %15 : vector<16x128xf32>
    %17 = arith.truncf %16 : vector<16x128xf32> to vector<16x128xbf16>
    %18 = vector.shape_cast %17 : vector<16x128xbf16> to vector<1x16x128xbf16>
    %cst_8 = arith.constant 0.000000e+00 : bf16
    %19 = vector.broadcast %cst_8 : bf16 to vector<1x1x128xbf16>
    %20 = vector.extract_strided_slice %18 {offsets = [0, 8, 0], sizes = [1, 7, 128], strides = [1, 1, 1]} : vector<1x16x128xbf16> to vector<1x7x128xbf16>
    %21 = vector.extract_strided_slice %18 {offsets = [0, 0, 0], sizes = [1, 8, 128], strides = [1, 1, 1]} : vector<1x16x128xbf16> to vector<1x8x128xbf16>
    %22 = tpu.concatenate %19, %20, %21 in 1 : vector<1x1x128xbf16>, vector<1x7x128xbf16>, vector<1x8x128xbf16> -> vector<1x16x128xbf16>
    %23 = vector.extract_strided_slice %18 {offsets = [0, 8, 0], sizes = [1, 8, 128], strides = [1, 1, 1]} : vector<1x16x128xbf16> to vector<1x8x128xbf16>
    %24 = vector.extract_strided_slice %18 {offsets = [0, 1, 0], sizes = [1, 7, 128], strides = [1, 1, 1]} : vector<1x16x128xbf16> to vector<1x7x128xbf16>
    %25 = tpu.concatenate %23, %24, %19 in 1 : vector<1x8x128xbf16>, vector<1x7x128xbf16>, vector<1x1x128xbf16> -> vector<1x16x128xbf16>
    %26 = tpu.concatenate %22, %18, %25 in 2 : vector<1x16x128xbf16>, vector<1x16x128xbf16>, vector<1x16x128xbf16> -> vector<1x16x384xbf16>
    %27 = vector.shape_cast %26 : vector<1x16x384xbf16> to vector<16x384xbf16>
    %c0_9 = arith.constant 0 : index
    %c0_10 = arith.constant 0 : index
    %28 = vector.load %arg3[%c0_9, %c0_10] : memref<384x128xbf16, #tpu.memory_space<vmem>>, vector<384x128xbf16>
    %cst_11 = arith.constant dense<0.000000e+00> : vector<16x128xf32>
    %29 = tpu.matmul %27, %28, %cst_11 {dimension_numbers = #tpu.dot_dimension_numbers<[1], [0], [0], [1], [0, 0, 1, 1], [], []>} : vector<16x384xbf16>, vector<384x128xbf16>, vector<16x128xf32> -> vector<16x128xf32>
    %c0_12 = arith.constant 0 : index
    %c0_13 = arith.constant 0 : index
    %30 = vector.load %arg5[%c0_12, %c0_13] : memref<1x128xf32, #tpu.memory_space<vmem>>, vector<1x128xf32>
    %31 = vector.broadcast %30 : vector<1x128xf32> to vector<16x128xf32>
    %32 = arith.addf %29, %31 : vector<16x128xf32>
    %cst_14 = arith.constant 0.000000e+00 : f32
    %33 = vector.broadcast %cst_14 : f32 to vector<16x128xf32>
    %34 = arith.maximumf %32, %33 : vector<16x128xf32>
    %35 = vector.shape_cast %34 : vector<16x128xf32> to vector<1x16x128xf32>
    %36 = vector.extract_strided_slice %35 {offsets = [0, 0, 0], sizes = [1, 8, 128], strides = [1, 1, 1]} : vector<1x16x128xf32> to vector<1x8x128xf32>
    %37 = vector.extract_strided_slice %35 {offsets = [0, 8, 0], sizes = [1, 8, 128], strides = [1, 1, 1]} : vector<1x16x128xf32> to vector<1x8x128xf32>
    %38 = arith.maximumf %36, %37 : vector<1x8x128xf32>
    %c0_15 = arith.constant 0 : index
    %c0_16 = arith.constant 0 : index
    %c0_17 = arith.constant 0 : index
    %39 = vector.load %arg6[%c0_15, %c0_16, %c0_17] : memref<1x8x128xf32, #tpu.memory_space<vmem>>, vector<1x8x128xf32>
    tpu.vector_store %arg6[%c0_15, %c0_16, %c0_17], %38 {strides = array<i32>} : memref<1x8x128xf32, #tpu.memory_space<vmem>>, vector<1x8x128xf32>,
    return
  }
  func.func @transform_0(%arg0: i32) -> (i32, i32, i32) {
    %c0_i32 = arith.constant 0 : i32
    %c0_i32_0 = arith.constant 0 : i32
    %c0_i32_1 = arith.constant 0 : i32
    return %arg0, %c0_i32, %c0_i32_0 : i32, i32, i32
  }
  func.func @transform_1(%arg0: i32) -> (i32, i32) {
    %c0_i32 = arith.constant 0 : i32
    %c0_i32_0 = arith.constant 0 : i32
    %c0_i32_1 = arith.constant 0 : i32
    return %c0_i32, %c0_i32_0 : i32, i32
  }
  func.func @transform_2(%arg0: i32) -> (i32, i32) {
    %c0_i32 = arith.constant 0 : i32
    %c0_i32_0 = arith.constant 0 : i32
    %c0_i32_1 = arith.constant 0 : i32
    return %c0_i32, %c0_i32_0 : i32, i32
  }
  func.func @transform_3(%arg0: i32) -> (i32, i32) {
    %c0_i32 = arith.constant 0 : i32
    %c0_i32_0 = arith.constant 0 : i32
    %c0_i32_1 = arith.constant 0 : i32
    return %c0_i32, %c0_i32_0 : i32, i32
  }
  func.func @transform_4(%arg0: i32) -> (i32, i32) {
    %c0_i32 = arith.constant 0 : i32
    %c0_i32_0 = arith.constant 0 : i32
    %c0_i32_1 = arith.constant 0 : i32
    return %c0_i32, %c0_i32_0 : i32, i32
  }
  func.func @transform_5(%arg0: i32) -> (i32, i32, i32) {
    %c0_i32 = arith.constant 0 : i32
    %c0_i32_0 = arith.constant 0 : i32
    %c0_i32_1 = arith.constant 0 : i32
    return %arg0, %c0_i32, %c0_i32_0 : i32, i32, i32
  }
}

</mosaic_0001>

<llo_original>
// kernel: flow1_pallas.1
$region0: #{flow1_pallas.1}
  #allocation0 [shape = 'u32[]', space=smem, size = 0x4, offset = 0x4, fixed_abs, tag = 'smem constant byte address 0x4 - core index']
  #allocation1 [shape = 'u32[144,128]{1,0:T(1,128)}', space=vmem, size = 0x12000, scoped, tag = 'internal scratch']
  %s0 = inlined_call_operand.vmem [shape: bf16[2,16,128], index: 0, kind: input, shape index: {}]
  %s1 = inlined_call_operand.vmem [shape: bf16[384,128], index: 1, kind: input, shape index: {}]
  %s2 = inlined_call_operand.vmem [shape: bf16[384,128], index: 2, kind: input, shape index: {}]
  %s3 = inlined_call_operand.vmem [shape: f32[1,128], index: 3, kind: input, shape index: {}]
  %s4 = inlined_call_operand.vmem [shape: f32[1,128], index: 4, kind: input, shape index: {}]
  %s5 = inlined_call_operand.vmem [shape: f32[2,8,128], index: 5, kind: output, shape index: {}]
  %s6 = sld [smem:[#allocation0]]
  $region53: #{flow1_pallas.1} parent=0
    _
  %s8 = ssub.s32 1, %s6
  %s9 = scalar_select 0, %s8, %s6
  loop: start=0, step=1, limit=4
  $region2: #{flow1_pallas.1} parent=0 // loop_pre_header
    _
  $region3: #{flow1_pallas.1} parent=0 // loop_header
    %s11 = sphi 0, %s15
    %p12 = scmp.ge.s32.totalorder %s11, 4
    %s21 = sphi 0, %s23
    %s24 = sphi 0, %s21
    %s25 = sphi 0, %s24
    %s41 = sphi 0, %s25
    %s45 = sphi 0, %s45
    %s47 = sphi 0, %s45
    %s48 = sphi 0, %s47
    %s62 = sphi 0, %s48
    %s66 = sphi 0, %s66
    %s68 = sphi 0, %s66
    %s69 = sphi 0, %s68
    %s83 = sphi 0, %s69
    %s87 = sphi 0, %s87
    %s89 = sphi 0, %s87
    %s90 = sphi 0, %s89
    %s104 = sphi 0, %s90
    %s108 = sphi 0, %s108
    %s110 = sphi 0, %s108
    %s111 = sphi 0, %s110
    %s125 = sphi 0, %s111
    %s131 = sphi 0, %s133
    %s134 = sphi 0, %s131
    %s135 = sphi 0, %s134
    %s151 = sphi 0, %s135
  $region4: #{flow1_pallas.1} parent=0 // loop_header_branch
    %14 = sbr.rel (%p12) target = $region8
  $region5: #{flow1_pallas.1} parent=0 // loop_body
    %s16 = ssub.s32 %s11, 1
    %s17 = ssub.s32 %s11, 2
    %s18 = sadd.s32 %s11, 1
    %s19 = ssub.s32 %s11, %s18
    %p20 = scmp.eq.s32.totalorder %s19, 0
    %s22 = sadd.s32 %s21, 1
    %s23 = scalar_select %p20, %s21, %s22
    %p26 = pneg %p20
    %p27 = scmp.eq.s32.totalorder %s11, 1
    %p28 = por %p26, %p27
    %p29 = scmp.ne.s32.totalorder %s21, %s24
    %p30 = scmp.eq.s32.totalorder %s11, 0
    %p31 = por %p29, %p30
    %p32 = scmp.ne.s32.totalorder %s21, %s24
    %p33 = scmp.eq.s32.totalorder %s16, 1
    %p34 = por %p32, %p33
    %p35 = scmp.ne.s32.totalorder %s24, %s25
    %p36 = scmp.eq.s32.totalorder %s16, 0
    %p37 = por %p35, %p36
    %p38 = scmp.ne.s32.totalorder %s24, %s25
    %p39 = scmp.eq.s32.totalorder %s17, 1
    %p40 = por %p38, %p39
    %p42 = scmp.ne.s32.totalorder %s25, %s41
    %p43 = scmp.eq.s32.totalorder %s17, 0
    %p44 = por %p42, %p43
    %s46 = sadd.s32 %s45, 1
    %p49 = scmp.eq.s32.totalorder %s11, 1
    %p50 = scmp.ne.s32.totalorder %s45, %s47
    %p51 = scmp.eq.s32.totalorder %s11, 0
    %p52 = por %p50, %p51
    %p53 = scmp.ne.s32.totalorder %s45, %s47
    %p54 = scmp.eq.s32.totalorder %s16, 1
    %p55 = por %p53, %p54
    %p56 = scmp.ne.s32.totalorder %s47, %s48
    %p57 = scmp.eq.s32.totalorder %s16, 0
    %p58 = por %p56, %p57
    %p59 = scmp.ne.s32.totalorder %s47, %s48
    %p60 = scmp.eq.s32.totalorder %s17, 1
    %p61 = por %p59, %p60
    %p63 = scmp.ne.s32.totalorder %s48, %s62
    %p64 = scmp.eq.s32.totalorder %s17, 0
    %p65 = por %p63, %p64
    %s67 = sadd.s32 %s66, 1
    %p70 = scmp.eq.s32.totalorder %s11, 1
    %p71 = scmp.ne.s32.totalorder %s66, %s68
    %p72 = scmp.eq.s32.totalorder %s11, 0
    %p73 = por %p71, %p72
    %p74 = scmp.ne.s32.totalorder %s66, %s68
    %p75 = scmp.eq.s32.totalorder %s16, 1
    %p76 = por %p74, %p75
    %p77 = scmp.ne.s32.totalorder %s68, %s69
    %p78 = scmp.eq.s32.totalorder %s16, 0
    %p79 = por %p77, %p78
    %p80 = scmp.ne.s32.totalorder %s68, %s69
    %p81 = scmp.eq.s32.totalorder %s17, 1
    %p82 = por %p80, %p81
    %p84 = scmp.ne.s32.totalorder %s69, %s83
    %p85 = scmp.eq.s32.totalorder %s17, 0
    %p86 = por %p84, %p85
    %s88 = sadd.s32 %s87, 1
    %p91 = scmp.eq.s32.totalorder %s11, 1
    %p92 = scmp.ne.s32.totalorder %s87, %s89
    %p93 = scmp.eq.s32.totalorder %s11, 0
    %p94 = por %p92, %p93
    %p95 = scmp.ne.s32.totalorder %s87, %s89
    %p96 = scmp.eq.s32.totalorder %s16, 1
    %p97 = por %p95, %p96
    %p98 = scmp.ne.s32.totalorder %s89, %s90
    %p99 = scmp.eq.s32.totalorder %s16, 0
    %p100 = por %p98, %p99
    %p101 = scmp.ne.s32.totalorder %s89, %s90
    %p102 = scmp.eq.s32.totalorder %s17, 1
    %p103 = por %p101, %p102
    %p105 = scmp.ne.s32.totalorder %s90, %s104
    %p106 = scmp.eq.s32.totalorder %s17, 0
    %p107 = por %p105, %p106
    %s109 = sadd.s32 %s108, 1
    %p112 = scmp.eq.s32.totalorder %s11, 1
    %p113 = scmp.ne.s32.totalorder %s108, %s110
    %p114 = scmp.eq.s32.totalorder %s11, 0
    %p115 = por %p113, %p114
    %p116 = scmp.ne.s32.totalorder %s108, %s110
    %p117 = scmp.eq.s32.totalorder %s16, 1
    %p118 = por %p116, %p117
    %p119 = scmp.ne.s32.totalorder %s110, %s111
    %p120 = scmp.eq.s32.totalorder %s16, 0
    %p121 = por %p119, %p120
    %p122 = scmp.ne.s32.totalorder %s110, %s111
    %p123 = scmp.eq.s32.totalorder %s17, 1
    %p124 = por %p122, %p123
    %p126 = scmp.ne.s32.totalorder %s111, %s125
    %p127 = scmp.eq.s32.totalorder %s17, 0
    %p128 = por %p126, %p127
    %s129 = ssub.s32 %s11, %s18
    %p130 = scmp.eq.s32.totalorder %s129, 0
    %s132 = sadd.s32 %s131, 1
    %s133 = scalar_select %p130, %s131, %s132
    %p136 = pneg %p130
    %p137 = scmp.eq.s32.totalorder %s11, 1
    %p138 = por %p136, %p137
    %p139 = scmp.ne.s32.totalorder %s131, %s134
    %p140 = scmp.eq.s32.totalorder %s11, 0
    %p141 = por %p139, %p140
    %p142 = scmp.ne.s32.totalorder %s131, %s134
    %p143 = scmp.eq.s32.totalorder %s16, 1
    %p144 = por %p142, %p143
    %p145 = scmp.ne.s32.totalorder %s134, %s135
    %p146 = scmp.eq.s32.totalorder %s16, 0
    %p147 = por %p145, %p146
    %p148 = scmp.ne.s32.totalorder %s134, %s135
    %p149 = scmp.eq.s32.totalorder %s17, 1
    %p150 = por %p148, %p149
    %p152 = scmp.ne.s32.totalorder %s135, %s151
    %p153 = scmp.eq.s32.totalorder %s17, 0
    %p154 = por %p152, %p153
    %p155 = scmp.le.s32.totalorder 1, %s11
    %p156 = scmp.lt.s32.totalorder %s11, 3
    %p157 = pnand %p155, %p156
    %p158 = pneg %p157
    // Predicated region
    $region9: #{flow1_pallas.1} parent=5 // pred_check
      _
    $region10: #{flow1_pallas.1} parent=5 // pred_check_branch
      %160 = sbr.rel (%p157) target = $region12
    $region11: #{flow1_pallas.1} parent=5 // pred_region
      %s161 = ssub.s32 %s11, 1
      // Predicated region
      $region13: #{flow1_pallas.1} parent=11 // pred_check
        %p162 = pneg %p58
      $region14: #{flow1_pallas.1} parent=11 // pred_check_branch
        %164 = sbr.rel (%p162) target = $region16
      $region15: #{flow1_pallas.1} parent=11 // pred_region
        _
      $region16: #{flow1_pallas.1} parent=11 // pred_fallthru
        _
      // Predicated region
      $region17: #{flow1_pallas.1} parent=11 // pred_check
        %p165 = pneg %p79
      $region18: #{flow1_pallas.1} parent=11 // pred_check_branch
        %167 = sbr.rel (%p165) target = $region20
      $region19: #{flow1_pallas.1} parent=11 // pred_region
        _
      $region20: #{flow1_pallas.1} parent=11 // pred_fallthru
        _
      // Predicated region
      $region21: #{flow1_pallas.1} parent=11 // pred_check
        %p168 = pneg %p100
      $region22: #{flow1_pallas.1} parent=11 // pred_check_branch
        %170 = sbr.rel (%p168) target = $region24
      $region23: #{flow1_pallas.1} parent=11 // pred_region
        _
      $region24: #{flow1_pallas.1} parent=11 // pred_fallthru
        _
      // Predicated region
      $region25: #{flow1_pallas.1} parent=11 // pred_check
        %p171 = pneg %p121
      $region26: #{flow1_pallas.1} parent=11 // pred_check_branch
        %173 = sbr.rel (%p171) target = $region28
      $region27: #{flow1_pallas.1} parent=11 // pred_region
        _
      $region28: #{flow1_pallas.1} parent=11 // pred_fallthru
        _
    $region12: #{flow1_pallas.1} parent=5 // pred_fallthru
      _
    %p174 = scmp.lt.s32.totalorder %s11, 2
    // Predicated region
    $region29: #{flow1_pallas.1} parent=5 // pred_check
      %p175 = pneg %p174
    $region30: #{flow1_pallas.1} parent=5 // pred_check_branch
      %177 = sbr.rel (%p175) target = $region32
    $region31: #{flow1_pallas.1} parent=5 // pred_region
      // Predicated region
      $region33: #{flow1_pallas.1} parent=31 // pred_check
        %p178 = pneg %p31
      $region34: #{flow1_pallas.1} parent=31 // pred_check_branch
        %180 = sbr.rel (%p178) target = $region36
      $region35: #{flow1_pallas.1} parent=31 // pred_region
        %p181 = scmp.lt.s32.totalorder %s11, 1
        %s182 = scalar_select %p181, %s11, 1
        %s183 = smul.addr %s182, 2
        %s184 = smul.addr %s183, 4
        %s185 = scalar_lea.vmem %s0, %s184
      $region36: #{flow1_pallas.1} parent=31 // pred_fallthru
        _
    $region32: #{flow1_pallas.1} parent=5 // pred_fallthru
      _
    %p186 = scmp.le.s32.totalorder 1, %s11
    %p187 = scmp.lt.s32.totalorder %s11, 3
    %p188 = pnand %p186, %p187
    %p189 = pneg %p188
    // Predicated region
    $region37: #{flow1_pallas.1} parent=5 // pred_check
      _
    $region38: #{flow1_pallas.1} parent=5 // pred_check_branch
      %191 = sbr.rel (%p188) target = $region40
    $region39: #{flow1_pallas.1} parent=5 // pred_region
      %s192 = ssub.s32 %s11, 1
      %p193 = scmp.lt.s32.totalorder %s16, 1
      %s194 = scalar_select %p193, %s16, 1
      %s195 = smul.addr %s194, 2
      %s196 = smul.addr %s195, 4
      %s197 = scalar_lea.vmem %s0, %s196
      %p198 = pneg %p37
      %p199 = pneg %p34
      %p200 = pneg %p58
      %p201 = pneg %p55
      %p202 = pneg %p79
      %p203 = pneg %p76
      %p204 = pneg %p100
      %p205 = pneg %p97
      %p206 = pneg %p121
      %p207 = pneg %p118
      %p208 = pneg %p147
      %p209 = pneg %p144
      %p210 = scmp.lt.s32.totalorder %s16, 1
      %s211 = scalar_select %p210, %s16, 1
      %s212 = smul.addr %s211, 8
      %s213 = scalar_lea.vmem %s5, %s212
      %p214 = scmp.lt.s32.totalorder %s16, 1
      %s215 = scalar_select %p214, %s16, 1
      %s216 = smul.addr %s215, 2
      %s217 = smul.addr %s216, 4
      %s218 = scalar_lea.vmem %s0, %s217
      %p219 = scmp.lt.s32.totalorder %s16, 1
      %s220 = scalar_select %p219, %s16, 1
      %s221 = smul.addr %s220, 8
      %s222 = scalar_lea.vmem %s5, %s221
      %v224 = vld [vmem:[%s218] sm:$0xf]
      %v225 = vld [vmem:[%s218 + $0x4] sm:$0xf]
      %v227 = vunpack.c.l.b16 %v225
      %v228 = vpack.c.b16 %v227, %v227
      %v230 = vshrl.u32 %v228, 16
      %v232 = vrot.slane %v230, 7
      %v233 = vshll.u32 %v228, 16
      %v235 = vor.u32 %v232, %v233
      %v238 = vunpack.c.l.b16 %v224
      %v239 = vpack.c.b16 %v238, %v238
      %vm240 = vcmask 1040384
      %vm241 = vsmask.f32 256
      %vm242 = vmand %vm240, %vm241
      %v243 = vsel %vm242, 0, %v235
      %vm244 = vcmask 1043456
      %v247 = vsel %vm244, %v243, %v239
      %v249 = vshrl.u32 %v239, 16
      %v251 = vrot.slane %v249, 4
      %v252 = vshll.u32 %v239, 16
      %v254 = vrot.slane %v252, 5
      %v255 = vor.u32 %v251, %v254
      %v258 = vsel %vm244, %v225, %v255
      %vm260 = vcmask 1047552
      %vm261 = vsmask.f32 7424
      %vm262 = vmand %vm260, %vm261
      %v263 = vsel %vm262, %v258, 0
      %v264 = vpack.c.b16 %v227, %v238
      %v266 = vld [vmem:[%s1] sm:$0xf]
      %v267 = vld [vmem:[%s1 + $0x4] sm:$0xf]
      %v268 = vld [vmem:[%s1 + $0x8] sm:$0xf]
      %v269 = vld [vmem:[%s1 + $0xc] sm:$0xf]
      %v270 = vld [vmem:[%s1 + $0x10] sm:$0xf]
      %v271 = vld [vmem:[%s1 + $0x14] sm:$0xf]
      %v272 = vld [vmem:[%s1 + $0x18] sm:$0xf]
      %v273 = vld [vmem:[%s1 + $0x1c] sm:$0xf]
      %v274 = vld [vmem:[%s1 + $0x20] sm:$0xf]
      %v275 = vld [vmem:[%s1 + $0x24] sm:$0xf]
      %v276 = vld [vmem:[%s1 + $0x28] sm:$0xf]
      %v277 = vld [vmem:[%s1 + $0x2c] sm:$0xf]
      %v278 = vld [vmem:[%s1 + $0x30] sm:$0xf]
      %v279 = vld [vmem:[%s1 + $0x34] sm:$0xf]
      %v280 = vld [vmem:[%s1 + $0x38] sm:$0xf]
      %v281 = vld [vmem:[%s1 + $0x3c] sm:$0xf]
      %v282 = vld [vmem:[%s1 + $0x40] sm:$0xf]
      %v283 = vld [vmem:[%s1 + $0x44] sm:$0xf]
      %v284 = vld [vmem:[%s1 + $0x48] sm:$0xf]
      %v285 = vld [vmem:[%s1 + $0x4c] sm:$0xf]
      %v286 = vld [vmem:[%s1 + $0x50] sm:$0xf]
      %v287 = vld [vmem:[%s1 + $0x54] sm:$0xf]
      %v288 = vld [vmem:[%s1 + $0x58] sm:$0xf]
      %v289 = vld [vmem:[%s1 + $0x5c] sm:$0xf]
      %v290 = vld [vmem:[%s1 + $0x60] sm:$0xf]
      %v291 = vld [vmem:[%s1 + $0x64] sm:$0xf]
      %v292 = vld [vmem:[%s1 + $0x68] sm:$0xf]
      %v293 = vld [vmem:[%s1 + $0x6c] sm:$0xf]
      %v294 = vld [vmem:[%s1 + $0x70] sm:$0xf]
      %v295 = vld [vmem:[%s1 + $0x74] sm:$0xf]
      %v296 = vld [vmem:[%s1 + $0x78] sm:$0xf]
      %v297 = vld [vmem:[%s1 + $0x7c] sm:$0xf]
      %v298 = vld [vmem:[%s1 + $0x80] sm:$0xf]
      %v299 = vld [vmem:[%s1 + $0x84] sm:$0xf]
      %v300 = vld [vmem:[%s1 + $0x88] sm:$0xf]
      %v301 = vld [vmem:[%s1 + $0x8c] sm:$0xf]
      %v302 = vld [vmem:[%s1 + $0x90] sm:$0xf]
      %v303 = vld [vmem:[%s1 + $0x94] sm:$0xf]
      %v304 = vld [vmem:[%s1 + $0x98] sm:$0xf]
      %v305 = vld [vmem:[%s1 + $0x9c] sm:$0xf]
      %v306 = vld [vmem:[%s1 + $0xa0] sm:$0xf]
      %v307 = vld [vmem:[%s1 + $0xa4] sm:$0xf]
      %v308 = vld [vmem:[%s1 + $0xa8] sm:$0xf]
      %v309 = vld [vmem:[%s1 + $0xac] sm:$0xf]
      %v310 = vld [vmem:[%s1 + $0xb0] sm:$0xf]
      %v311 = vld [vmem:[%s1 + $0xb4] sm:$0xf]
      %v312 = vld [vmem:[%s1 + $0xb8] sm:$0xf]
      %v313 = vld [vmem:[%s1 + $0xbc] sm:$0xf]
      %v314 = vld [vmem:[%s3] sm:$0x1]
      %v316 = vlaneseq
      %v317 = vshrl.u32 %v316, 7
      %v318 = vsub.s32 0, %v317
      %v319 = vrot.slane %v314, %v318
      %v369 = vunpack.c.l.b16 %v266
      %v370 = vunpack.c.l.b16 %v267
      %v371 = vunpack.c.l.b16 %v268
      %v372 = vunpack.c.l.b16 %v269
      %v373 = vunpack.c.l.b16 %v270
      %v374 = vunpack.c.l.b16 %v271
      %v375 = vunpack.c.l.b16 %v272
      %v376 = vunpack.c.l.b16 %v273
      %v377 = vunpack.c.l.b16 %v274
      %v378 = vunpack.c.l.b16 %v275
      %v379 = vunpack.c.l.b16 %v276
      %v380 = vunpack.c.l.b16 %v277
      %v381 = vunpack.c.l.b16 %v278
      %v382 = vunpack.c.l.b16 %v279
      %v383 = vunpack.c.l.b16 %v280
      %v384 = vunpack.c.l.b16 %v281
      %v385 = vunpack.c.l.b16 %v282
      %v386 = vunpack.c.l.b16 %v283
      %v387 = vunpack.c.l.b16 %v284
      %v388 = vunpack.c.l.b16 %v285
      %v389 = vunpack.c.l.b16 %v286
      %v390 = vunpack.c.l.b16 %v287
      %v391 = vunpack.c.l.b16 %v288
      %v392 = vunpack.c.l.b16 %v289
      %v393 = vunpack.c.l.b16 %v290
      %v394 = vunpack.c.l.b16 %v291
      %v395 = vunpack.c.l.b16 %v292
      %v396 = vunpack.c.l.b16 %v293
      %v397 = vunpack.c.l.b16 %v294
      %v398 = vunpack.c.l.b16 %v295
      %v399 = vunpack.c.l.b16 %v296
      %v400 = vunpack.c.l.b16 %v297
      %v401 = vunpack.c.l.b16 %v298
      %v402 = vunpack.c.l.b16 %v299
      %v403 = vunpack.c.l.b16 %v300
      %v404 = vunpack.c.l.b16 %v301
      %v405 = vunpack.c.l.b16 %v302
      %v406 = vunpack.c.l.b16 %v303
      %v407 = vunpack.c.l.b16 %v304
      %v408 = vunpack.c.l.b16 %v305
      %v409 = vunpack.c.l.b16 %v306
      %v410 = vunpack.c.l.b16 %v307
      %v411 = vunpack.c.l.b16 %v308
      %v412 = vunpack.c.l.b16 %v309
      %v413 = vunpack.c.l.b16 %v310
      %v414 = vunpack.c.l.b16 %v311
      %v415 = vunpack.c.l.b16 %v312
      %v416 = vunpack.c.l.b16 %v313
      %v417 = vpack.c.b16 %v370, %v369
      %v418 = vpack.c.b16 %v372, %v371
      %v419 = vpack.c.b16 %v374, %v373
      %v420 = vpack.c.b16 %v376, %v375
      %v421 = vpack.c.b16 %v378, %v377
      %v422 = vpack.c.b16 %v380, %v379
      %v423 = vpack.c.b16 %v382, %v381
      %v424 = vpack.c.b16 %v384, %v383
      %v425 = vpack.c.b16 %v386, %v385
      %v426 = vpack.c.b16 %v388, %v387
      %v427 = vpack.c.b16 %v390, %v389
      %v428 = vpack.c.b16 %v392, %v391
      %v429 = vpack.c.b16 %v394, %v393
      %v430 = vpack.c.b16 %v396, %v395
      %v431 = vpack.c.b16 %v398, %v397
      %v432 = vpack.c.b16 %v400, %v399
      %v433 = vpack.c.b16 %v402, %v401
      %v434 = vpack.c.b16 %v404, %v403
      %v435 = vpack.c.b16 %v406, %v405
      %v436 = vpack.c.b16 %v408, %v407
      %v437 = vpack.c.b16 %v410, %v409
      %v438 = vpack.c.b16 %v412, %v411
      %v439 = vpack.c.b16 %v414, %v413
      %v440 = vpack.c.b16 %v416, %v415
      %465 = vmatprep.subr.bf16.mxu0 0
      %466 = vmatpush1.bf16.msra.mxu0 %v417
      %467 = vmatprep.subr.bf16.mxu0 0
      %468 = vmatpush1.bf16.msra.mxu0 %v418
      %469 = vmatprep.subr.bf16.mxu0 0
      %470 = vmatpush1.bf16.msra.mxu0 %v419
      %471 = vmatprep.subr.bf16.mxu0 0
      %472 = vmatpush1.bf16.msra.mxu0 %v420
      %473 = vmatprep.subr.bf16.mxu0 0
      %474 = vmatpush1.bf16.msra.mxu0 %v421
      %475 = vmatprep.subr.bf16.mxu0 0
      %476 = vmatpush1.bf16.msra.mxu0 %v422
      %477 = vmatprep.subr.bf16.mxu0 0
      %478 = vmatpush1.bf16.msra.mxu0 %v423
      %479 = vmatprep.subr.bf16.mxu0 0
      %480 = vmatpush1.bf16.msra.mxu0 %v424
      %481 = vmatprep.subr.bf16.mxu0 0
      %482 = vmatpush1.bf16.msra.mxu0 %v425
      %483 = vmatprep.subr.bf16.mxu0 0
      %484 = vmatpush1.bf16.msra.mxu0 %v426
      %485 = vmatprep.subr.bf16.mxu0 0
      %486 = vmatpush1.bf16.msra.mxu0 %v427
      %487 = vmatprep.subr.bf16.mxu0 0
      %488 = vmatpush1.bf16.msra.mxu0 %v428
      %489 = vmatprep.subr.bf16.mxu0 0
      %490 = vmatpush1.bf16.msra.mxu0 %v429
      %491 = vmatprep.subr.bf16.mxu0 0
      %492 = vmatpush1.bf16.msra.mxu0 %v430
      %493 = vmatprep.subr.bf16.mxu0 0
      %494 = vmatpush1.bf16.msra.mxu0 %v431
      %495 = vmatprep.subr.bf16.mxu0 0
      %496 = vmatpush1.bf16.msra.mxu0 %v432
      %497 = vmatprep.mubr.bf16.mxu0 %v264
      %498 = vmatmul.mubr.bf16.gmra.mrb[0].mxu0 %v247
      %v499 = vpop.f32.mrb[0].mxu0
      %v500 = vadd.f32 %v319, %v499
      %v501 = vpop.f32.mrb[0].mxu0
      %v502 = vpop.f32.mrb[0].mxu0
      %v503 = vadd.f32 %v319, %v502
      %v504 = vpop.f32.mrb[0].mxu0
      %505 = vdwg.mxu0
      %506 = vmatprep.subr.bf16.mxu0 0
      %507 = vmatpush1.bf16.msra.mxu0 %v433
      %508 = vmatprep.subr.bf16.mxu0 0
      %509 = vmatpush1.bf16.msra.mxu0 %v434
      %510 = vmatprep.subr.bf16.mxu0 0
      %511 = vmatpush1.bf16.msra.mxu0 %v435
      %512 = vmatprep.subr.bf16.mxu0 0
      %513 = vmatpush1.bf16.msra.mxu0 %v436
      %514 = vmatprep.subr.bf16.mxu0 0
      %515 = vmatpush1.bf16.msra.mxu0 %v437
      %516 = vmatprep.subr.bf16.mxu0 0
      %517 = vmatpush1.bf16.msra.mxu0 %v438
      %518 = vmatprep.subr.bf16.mxu0 0
      %519 = vmatpush1.bf16.msra.mxu0 %v439
      %520 = vmatprep.subr.bf16.mxu0 0
      %521 = vmatpush1.bf16.msra.mxu0 %v440
      %522 = vmatprep.subr.bf16.mxu0 0
      %523 = vmatpush1.bf16.msra.mxu0 0
      %524 = vmatprep.subr.bf16.mxu0 0
      %525 = vmatpush1.bf16.msra.mxu0 0
      %526 = vmatprep.subr.bf16.mxu0 0
      %527 = vmatpush1.bf16.msra.mxu0 0
      %528 = vmatprep.subr.bf16.mxu0 0
      %529 = vmatpush1.bf16.msra.mxu0 0
      %530 = vmatprep.subr.bf16.mxu0 0
      %531 = vmatpush1.bf16.msra.mxu0 0
      %532 = vmatprep.subr.bf16.mxu0 0
      %533 = vmatpush1.bf16.msra.mxu0 0
      %534 = vmatprep.subr.bf16.mxu0 0
      %535 = vmatpush1.bf16.msra.mxu0 0
      %536 = vmatprep.subr.bf16.mxu0 0
      %537 = vmatpush1.bf16.msra.mxu0 0
      %538 = vmatprep.mubr.bf16.mxu0 0
      %539 = vmatmul.mubr.bf16.gmra.mrb[0].mxu0 %v263
      %v540 = vpop.f32.mrb[0].mxu0
      %v541 = vadd.f32 %v500, %v540
      %v542 = vpop.f32.mrb[0].mxu0
      %v543 = vpop.f32.mrb[0].mxu0
      %v544 = vadd.f32 %v503, %v543
      %v545 = vpop.f32.mrb[0].mxu0
      %546 = vdwg.mxu0
      %v547 = vmax.f32 %v541, 0.0
      %v548 = vmax.f32 %v544, 0.0
      %v549 = vpack.c.bf16 %v548, %v547
      %v551 = vshrl.u32 %v549, 16
      %v553 = vrot.slane %v551, 3
      %v554 = vshll.u32 %v549, 16
      %v556 = vrot.slane %v554, 4
      %v557 = vor.u32 %v553, %v556
      %v560 = vrot.slane %v549, 4
      %v561 = vsel %vm242, 0, %v557
      %v564 = vsel %vm244, %v561, %v560
      %v566 = vrot.slane %v551, 4
      %v567 = vrot.slane %v554, 5
      %v568 = vor.u32 %v566, %v567
      %v570 = vsel %vm244, %v560, %v568
      %v572 = vsel %vm262, %v570, 0
      %v573 = vld [vmem:[%s2] sm:$0xf]
      %v574 = vld [vmem:[%s2 + $0x4] sm:$0xf]
      %v575 = vld [vmem:[%s2 + $0x8] sm:$0xf]
      %v576 = vld [vmem:[%s2 + $0xc] sm:$0xf]
      %v577 = vld [vmem:[%s2 + $0x10] sm:$0xf]
      %v578 = vld [vmem:[%s2 + $0x14] sm:$0xf]
      %v579 = vld [vmem:[%s2 + $0x18] sm:$0xf]
      %v580 = vld [vmem:[%s2 + $0x1c] sm:$0xf]
      %v581 = vld [vmem:[%s2 + $0x20] sm:$0xf]
      %v582 = vld [vmem:[%s2 + $0x24] sm:$0xf]
      %v583 = vld [vmem:[%s2 + $0x28] sm:$0xf]
      %v584 = vld [vmem:[%s2 + $0x2c] sm:$0xf]
      %v585 = vld [vmem:[%s2 + $0x30] sm:$0xf]
      %v586 = vld [vmem:[%s2 + $0x34] sm:$0xf]
      %v587 = vld [vmem:[%s2 + $0x38] sm:$0xf]
      %v588 = vld [vmem:[%s2 + $0x3c] sm:$0xf]
      %v589 = vld [vmem:[%s2 + $0x40] sm:$0xf]
      %v590 = vld [vmem:[%s2 + $0x44] sm:$0xf]
      %v591 = vld [vmem:[%s2 + $0x48] sm:$0xf]
      %v592 = vld [vmem:[%s2 + $0x4c] sm:$0xf]
      %v593 = vld [vmem:[%s2 + $0x50] sm:$0xf]
      %v594 = vld [vmem:[%s2 + $0x54] sm:$0xf]
      %v595 = vld [vmem:[%s2 + $0x58] sm:$0xf]
      %v596 = vld [vmem:[%s2 + $0x5c] sm:$0xf]
      %v597 = vld [vmem:[%s2 + $0x60] sm:$0xf]
      %v598 = vld [vmem:[%s2 + $0x64] sm:$0xf]
      %v599 = vld [vmem:[%s2 + $0x68] sm:$0xf]
      %v600 = vld [vmem:[%s2 + $0x6c] sm:$0xf]
      %v601 = vld [vmem:[%s2 + $0x70] sm:$0xf]
      %v602 = vld [vmem:[%s2 + $0x74] sm:$0xf]
      %v603 = vld [vmem:[%s2 + $0x78] sm:$0xf]
      %v604 = vld [vmem:[%s2 + $0x7c] sm:$0xf]
      %v605 = vld [vmem:[%s2 + $0x80] sm:$0xf]
      %v606 = vld [vmem:[%s2 + $0x84] sm:$0xf]
      %v607 = vld [vmem:[%s2 + $0x88] sm:$0xf]
      %v608 = vld [vmem:[%s2 + $0x8c] sm:$0xf]
      %v609 = vld [vmem:[%s2 + $0x90] sm:$0xf]
      %v610 = vld [vmem:[%s2 + $0x94] sm:$0xf]
      %v611 = vld [vmem:[%s2 + $0x98] sm:$0xf]
      %v612 = vld [vmem:[%s2 + $0x9c] sm:$0xf]
      %v613 = vld [vmem:[%s2 + $0xa0] sm:$0xf]
      %v614 = vld [vmem:[%s2 + $0xa4] sm:$0xf]
      %v615 = vld [vmem:[%s2 + $0xa8] sm:$0xf]
      %v616 = vld [vmem:[%s2 + $0xac] sm:$0xf]
      %v617 = vld [vmem:[%s2 + $0xb0] sm:$0xf]
      %v618 = vld [vmem:[%s2 + $0xb4] sm:$0xf]
      %v619 = vld [vmem:[%s2 + $0xb8] sm:$0xf]
      %v620 = vld [vmem:[%s2 + $0xbc] sm:$0xf]
      %v621 = vld [vmem:[%s4] sm:$0x1]
      %v623 = vlaneseq
      %v624 = vshrl.u32 %v623, 7
      %v625 = vsub.s32 0, %v624
      %v626 = vrot.slane %v621, %v625
      %v676 = vunpack.c.l.b16 %v573
      %v677 = vunpack.c.l.b16 %v574
      %v678 = vunpack.c.l.b16 %v575
      %v679 = vunpack.c.l.b16 %v576
      %v680 = vunpack.c.l.b16 %v577
      %v681 = vunpack.c.l.b16 %v578
      %v682 = vunpack.c.l.b16 %v579
      %v683 = vunpack.c.l.b16 %v580
      %v684 = vunpack.c.l.b16 %v581
      %v685 = vunpack.c.l.b16 %v582
      %v686 = vunpack.c.l.b16 %v583
      %v687 = vunpack.c.l.b16 %v584
      %v688 = vunpack.c.l.b16 %v585
      %v689 = vunpack.c.l.b16 %v586
      %v690 = vunpack.c.l.b16 %v587
      %v691 = vunpack.c.l.b16 %v588
      %v692 = vunpack.c.l.b16 %v589
      %v693 = vunpack.c.l.b16 %v590
      %v694 = vunpack.c.l.b16 %v591
      %v695 = vunpack.c.l.b16 %v592
      %v696 = vunpack.c.l.b16 %v593
      %v697 = vunpack.c.l.b16 %v594
      %v698 = vunpack.c.l.b16 %v595
      %v699 = vunpack.c.l.b16 %v596
      %v700 = vunpack.c.l.b16 %v597
      %v701 = vunpack.c.l.b16 %v598
      %v702 = vunpack.c.l.b16 %v599
      %v703 = vunpack.c.l.b16 %v600
      %v704 = vunpack.c.l.b16 %v601
      %v705 = vunpack.c.l.b16 %v602
      %v706 = vunpack.c.l.b16 %v603
      %v707 = vunpack.c.l.b16 %v604
      %v708 = vunpack.c.l.b16 %v605
      %v709 = vunpack.c.l.b16 %v606
      %v710 = vunpack.c.l.b16 %v607
      %v711 = vunpack.c.l.b16 %v608
      %v712 = vunpack.c.l.b16 %v609
      %v713 = vunpack.c.l.b16 %v610
      %v714 = vunpack.c.l.b16 %v611
      %v715 = vunpack.c.l.b16 %v612
      %v716 = vunpack.c.l.b16 %v613
      %v717 = vunpack.c.l.b16 %v614
      %v718 = vunpack.c.l.b16 %v615
      %v719 = vunpack.c.l.b16 %v616
      %v720 = vunpack.c.l.b16 %v617
      %v721 = vunpack.c.l.b16 %v618
      %v722 = vunpack.c.l.b16 %v619
      %v723 = vunpack.c.l.b16 %v620
      %v724 = vpack.c.b16 %v677, %v676
      %v725 = vpack.c.b16 %v679, %v678
      %v726 = vpack.c.b16 %v681, %v680
      %v727 = vpack.c.b16 %v683, %v682
      %v728 = vpack.c.b16 %v685, %v684
      %v729 = vpack.c.b16 %v687, %v686
      %v730 = vpack.c.b16 %v689, %v688
      %v731 = vpack.c.b16 %v691, %v690
      %v732 = vpack.c.b16 %v693, %v692
      %v733 = vpack.c.b16 %v695, %v694
      %v734 = vpack.c.b16 %v697, %v696
      %v735 = vpack.c.b16 %v699, %v698
      %v736 = vpack.c.b16 %v701, %v700
      %v737 = vpack.c.b16 %v703, %v702
      %v738 = vpack.c.b16 %v705, %v704
      %v739 = vpack.c.b16 %v707, %v706
      %v740 = vpack.c.b16 %v709, %v708
      %v741 = vpack.c.b16 %v711, %v710
      %v742 = vpack.c.b16 %v713, %v712
      %v743 = vpack.c.b16 %v715, %v714
      %v744 = vpack.c.b16 %v717, %v716
      %v745 = vpack.c.b16 %v719, %v718
      %v746 = vpack.c.b16 %v721, %v720
      %v747 = vpack.c.b16 %v723, %v722
      %772 = vmatprep.subr.bf16.mxu0 0
      %773 = vmatpush1.bf16.msra.mxu0 %v724
      %774 = vmatprep.subr.bf16.mxu0 0
      %775 = vmatpush1.bf16.msra.mxu0 %v725
      %776 = vmatprep.subr.bf16.mxu0 0
      %777 = vmatpush1.bf16.msra.mxu0 %v726
      %778 = vmatprep.subr.bf16.mxu0 0
      %779 = vmatpush1.bf16.msra.mxu0 %v727
      %780 = vmatprep.subr.bf16.mxu0 0
      %781 = vmatpush1.bf16.msra.mxu0 %v728
      %782 = vmatprep.subr.bf16.mxu0 0
      %783 = vmatpush1.bf16.msra.mxu0 %v729
      %784 = vmatprep.subr.bf16.mxu0 0
      %785 = vmatpush1.bf16.msra.mxu0 %v730
      %786 = vmatprep.subr.bf16.mxu0 0
      %787 = vmatpush1.bf16.msra.mxu0 %v731
      %788 = vmatprep.subr.bf16.mxu0 0
      %789 = vmatpush1.bf16.msra.mxu0 %v732
      %790 = vmatprep.subr.bf16.mxu0 0
      %791 = vmatpush1.bf16.msra.mxu0 %v733
      %792 = vmatprep.subr.bf16.mxu0 0
      %793 = vmatpush1.bf16.msra.mxu0 %v734
      %794 = vmatprep.subr.bf16.mxu0 0
      %795 = vmatpush1.bf16.msra.mxu0 %v735
      %796 = vmatprep.subr.bf16.mxu0 0
      %797 = vmatpush1.bf16.msra.mxu0 %v736
      %798 = vmatprep.subr.bf16.mxu0 0
      %799 = vmatpush1.bf16.msra.mxu0 %v737
      %800 = vmatprep.subr.bf16.mxu0 0
      %801 = vmatpush1.bf16.msra.mxu0 %v738
      %802 = vmatprep.subr.bf16.mxu0 0
      %803 = vmatpush1.bf16.msra.mxu0 %v739
      %804 = vmatprep.mubr.bf16.mxu0 %v549
      %805 = vmatmul.mubr.bf16.gmra.mrb[0].mxu0 %v564
      %v806 = vpop.f32.mrb[0].mxu0
      %v807 = vadd.f32 %v626, %v806
      %v808 = vpop.f32.mrb[0].mxu0
      %v809 = vpop.f32.mrb[0].mxu0
      %v810 = vadd.f32 %v626, %v809
      %v811 = vpop.f32.mrb[0].mxu0
      %812 = vdwg.mxu0
      %813 = vmatprep.subr.bf16.mxu0 0
      %814 = vmatpush1.bf16.msra.mxu0 %v740
      %815 = vmatprep.subr.bf16.mxu0 0
      %816 = vmatpush1.bf16.msra.mxu0 %v741
      %817 = vmatprep.subr.bf16.mxu0 0
      %818 = vmatpush1.bf16.msra.mxu0 %v742
      %819 = vmatprep.subr.bf16.mxu0 0
      %820 = vmatpush1.bf16.msra.mxu0 %v743
      %821 = vmatprep.subr.bf16.mxu0 0
      %822 = vmatpush1.bf16.msra.mxu0 %v744
      %823 = vmatprep.subr.bf16.mxu0 0
      %824 = vmatpush1.bf16.msra.mxu0 %v745
      %825 = vmatprep.subr.bf16.mxu0 0
      %826 = vmatpush1.bf16.msra.mxu0 %v746
      %827 = vmatprep.subr.bf16.mxu0 0
      %828 = vmatpush1.bf16.msra.mxu0 %v747
      %829 = vmatprep.subr.bf16.mxu0 0
      %830 = vmatpush1.bf16.msra.mxu0 0
      %831 = vmatprep.subr.bf16.mxu0 0
      %832 = vmatpush1.bf16.msra.mxu0 0
      %833 = vmatprep.subr.bf16.mxu0 0
      %834 = vmatpush1.bf16.msra.mxu0 0
      %835 = vmatprep.subr.bf16.mxu0 0
      %836 = vmatpush1.bf16.msra.mxu0 0
      %837 = vmatprep.subr.bf16.mxu0 0
      %838 = vmatpush1.bf16.msra.mxu0 0
      %839 = vmatprep.subr.bf16.mxu0 0
      %840 = vmatpush1.bf16.msra.mxu0 0
      %841 = vmatprep.subr.bf16.mxu0 0
      %842 = vmatpush1.bf16.msra.mxu0 0
      %843 = vmatprep.subr.bf16.mxu0 0
      %844 = vmatpush1.bf16.msra.mxu0 0
      %845 = vmatprep.mubr.bf16.mxu0 0
      %846 = vmatmul.mubr.bf16.gmra.mrb[0].mxu0 %v572
      %v847 = vpop.f32.mrb[0].mxu0
      %v848 = vadd.f32 %v807, %v847
      %v849 = vpop.f32.mrb[0].mxu0
      %v850 = vpop.f32.mrb[0].mxu0
      %v851 = vadd.f32 %v810, %v850
      %v852 = vpop.f32.mrb[0].mxu0
      %853 = vdwg.mxu0
      %v854 = vmax.f32 %v848, 0.0
      %v855 = vmax.f32 %v851, 0.0
      %v856 = vmax.f32 %v854, %v855
      %857 = vst [vmem:[%s222] sm:$0xff] %v856
      %p858 = scmp.lt.s32.totalorder %s16, 1
      %s859 = scalar_select %p858, %s16, 1
      %s860 = smul.addr %s859, 8
      %s861 = scalar_lea.vmem %s5, %s860
      // Predicated region
      $region41: #{flow1_pallas.1} parent=39 // pred_check
        %p862 = pneg %p144
      $region42: #{flow1_pallas.1} parent=39 // pred_check_branch
        %864 = sbr.rel (%p862) target = $region44
      $region43: #{flow1_pallas.1} parent=39 // pred_region
        _
      $region44: #{flow1_pallas.1} parent=39 // pred_fallthru
        _
    $region40: #{flow1_pallas.1} parent=5 // pred_fallthru
      _
    %p865 = scmp.le.s32.totalorder 2, %s11
    // Predicated region
    $region45: #{flow1_pallas.1} parent=5 // pred_check
      %p866 = pneg %p865
    $region46: #{flow1_pallas.1} parent=5 // pred_check_branch
      %868 = sbr.rel (%p866) target = $region48
    $region47: #{flow1_pallas.1} parent=5 // pred_region
      %s869 = ssub.s32 %s11, 2
      // Predicated region
      $region49: #{flow1_pallas.1} parent=47 // pred_check
        %p870 = pneg %p150
      $region50: #{flow1_pallas.1} parent=47 // pred_check_branch
        %872 = sbr.rel (%p870) target = $region52
      $region51: #{flow1_pallas.1} parent=47 // pred_region
        %p873 = scmp.lt.s32.totalorder %s17, 1
        %s874 = scalar_select %p873, %s17, 1
        %s875 = smul.addr %s874, 8
        %s876 = scalar_lea.vmem %s5, %s875
      $region52: #{flow1_pallas.1} parent=47 // pred_fallthru
        _
    $region48: #{flow1_pallas.1} parent=5 // pred_fallthru
      _
  $region6: #{flow1_pallas.1} parent=0 // loop_footer
    %s15 = sadd.s32 1, %s11
  $region7: #{flow1_pallas.1} parent=0 // loop_footer_branch
    %10 = sbr.rel target = $region3
  $region8: #{flow1_pallas.1} parent=0 // loop_exit
    _

</llo_original>
